<compile_context>
chip_gen: v5e
topology: v5e:2x2
jax: 0.10.0
libtpu: 0.0.40
codegen_flags: <defaults>
</compile_context>

<pallas_src>
import functools

import jax
import jax.numpy as jnp
from jax.experimental import pallas as pl
from jax.experimental.pallas import tpu as pltpu


def _edge_lognorm_kernel(xs_ref, xd_ref, out_ref, *, eps):
    # xs_ref / xd_ref: (F, tile_e) tiles of gathered src / dst node features,
    # with edges on the lane (last) axis.
    d = xs_ref[...] - xd_ref[...]                          # (F, tile_e)
    sq = jnp.sum(d * d, axis=0, keepdims=True)             # (1, tile_e)
    # sqrt/log go to the EUP slot and are hidden behind the memory pipeline.
    out_ref[...] = jnp.log(eps + jnp.sqrt(sq))             # (1, tile_e)


def sp_graphlog_kernel_layer(x, edge, *, log_eps, tile_e=1024):
    """JAX/Pallas equivalent of SpGraphlogKernelLayer.forward(x, edge)."""
    x = jnp.asarray(x, dtype=jnp.float32)
    edge = jnp.asarray(edge, dtype=jnp.int32)

    N, F = x.shape
    E = edge.shape[1]

    # Pad only the O(E) index arrays (cheap). Index 0 is always a valid row,
    # so padded lanes gather real data and are simply sliced off at the end.
    E_pad = pl.cdiv(E, tile_e) * tile_e
    src_idx = edge[0]
    dst_idx = edge[1]
    if E_pad != E:
        pad = E_pad - E
        src_idx = jnp.pad(src_idx, (0, pad))
        dst_idx = jnp.pad(dst_idx, (0, pad))

    # Data-dependent gather (XLA glue). Gather columns of x^T so the slabs
    # come out directly in the lane-dense (F, E_pad) layout with no extra
    # transpose/pad pass over the big arrays.
    xT = x.T                                               # (F, N), small
    x_src = jnp.take(xT, src_idx, axis=1)                  # (F, E_pad)
    x_dst = jnp.take(xT, dst_idx, axis=1)                  # (F, E_pad)

    kernel = functools.partial(_edge_lognorm_kernel, eps=float(log_eps))

    out = pl.pallas_call(
        kernel,
        out_shape=jax.ShapeDtypeStruct((1, E_pad), jnp.float32),
        grid=(E_pad // tile_e,),
        in_specs=[
            pl.BlockSpec((F, tile_e), lambda i: (0, i)),
            pl.BlockSpec((F, tile_e), lambda i: (0, i)),
        ],
        out_specs=pl.BlockSpec((1, tile_e), lambda i: (0, i)),
        compiler_params=pltpu.CompilerParams(
            dimension_semantics=("parallel",)
        ),
    )(x_src, x_dst)

    return out[0, :E]                                      # (E,)


if __name__ == "__main__":
    key = jax.random.PRNGKey(0)
    k_x, k_e = jax.random.split(key)

    # Small shapes consistent with the module: N nodes, F features, E edges.
    N, F, E = 16, 32, 64
    log_eps = 1e-3  # opt['log_eps']

    x = jax.random.normal(k_x, (N, F), dtype=jnp.float32)
    edge = jax.random.randint(k_e, (2, E), minval=0, maxval=N, dtype=jnp.int32)

    fwd = jax.jit(functools.partial(sp_graphlog_kernel_layer, log_eps=log_eps))
    k_out = fwd(x, edge)
    k_out = jax.block_until_ready(k_out)

    # Pure-JAX reference for a correctness sanity check.
    diff = x[edge[0], :] - x[edge[1], :]
    k_ref = jnp.log(log_eps + jnp.sqrt(jnp.sum(diff * diff, axis=1)))

    assert k_out.shape == (E,)
    assert jnp.allclose(k_out, k_ref, atol=1e-5, rtol=1e-5)

    print("KERNEL_OK")
</pallas_src>

<mosaic_0001>
module attributes {stable_mosaic.version = 11 : i64} {
  func.func @_edge_lognorm_kernel(%arg0: i32, %arg1: memref<32x1024xf32, #tpu.memory_space<vmem>>, %arg2: memref<32x1024xf32, #tpu.memory_space<vmem>>, %arg3: memref<1x1024xf32, #tpu.memory_space<vmem>>) attributes {dimension_semantics = [#tpu.dimension_semantics<parallel>], iteration_bounds = array<i64: 1>, scalar_prefetch = 0 : i64, scratch_operands = 0 : i64, tpu.core_type = #tpu.core_type<tc>, window_params = [{transform_indices = @transform_0, window_bounds = array<i64: 32, 1024>}, {transform_indices = @transform_1, window_bounds = array<i64: 32, 1024>}, {transform_indices = @transform_2, window_bounds = array<i64: 1, 1024>}]} {
    %c0 = arith.constant 0 : index
    %c0_0 = arith.constant 0 : index
    %0 = vector.load %arg1[%c0, %c0_0] : memref<32x1024xf32, #tpu.memory_space<vmem>>, vector<32x1024xf32>
    %c0_1 = arith.constant 0 : index
    %c0_2 = arith.constant 0 : index
    %1 = vector.load %arg2[%c0_1, %c0_2] : memref<32x1024xf32, #tpu.memory_space<vmem>>, vector<32x1024xf32>
    %2 = arith.subf %0, %1 : vector<32x1024xf32>
    %3 = arith.mulf %2, %2 : vector<32x1024xf32>
    %cst = arith.constant dense<0.000000e+00> : vector<1024xf32>
    %4 = vector.multi_reduction <add>, %3, %cst [0] : vector<32x1024xf32> to vector<1024xf32>
    %5 = vector.shape_cast %4 : vector<1024xf32> to vector<1x1024xf32>
    %6 = math.sqrt %5 : vector<1x1024xf32>
    %cst_3 = arith.constant 1.000000e-03 : f32
    %7 = vector.broadcast %cst_3 : f32 to vector<1x1024xf32>
    %8 = arith.addf %7, %6 : vector<1x1024xf32>
    %9 = math.log %8 : vector<1x1024xf32>
    %c0_4 = arith.constant 0 : index
    %c0_5 = arith.constant 0 : index
    %10 = vector.load %arg3[%c0_4, %c0_5] : memref<1x1024xf32, #tpu.memory_space<vmem>>, vector<1x1024xf32>
    tpu.vector_store %arg3[%c0_4, %c0_5], %9 {strides = array<i32>} : memref<1x1024xf32, #tpu.memory_space<vmem>>, vector<1x1024xf32>,
    return
  }
  func.func @transform_0(%arg0: i32) -> (i32, i32) {
    %c0_i32 = arith.constant 0 : i32
    %c0_i32_0 = arith.constant 0 : i32
    return %c0_i32, %arg0 : i32, i32
  }
  func.func @transform_1(%arg0: i32) -> (i32, i32) {
    %c0_i32 = arith.constant 0 : i32
    %c0_i32_0 = arith.constant 0 : i32
    return %c0_i32, %arg0 : i32, i32
  }
  func.func @transform_2(%arg0: i32) -> (i32, i32) {
    %c0_i32 = arith.constant 0 : i32
    %c0_i32_0 = arith.constant 0 : i32
    return %c0_i32, %arg0 : i32, i32
  }
}

</mosaic_0001>

<llo_original>
// kernel: sp_graphlog_kernel_layer.1
$region0: #{sp_graphlog_kernel_layer.1}
  #allocation0 [shape = 'u32[]', space=smem, size = 0x4, offset = 0x4, fixed_abs, tag = 'smem constant byte address 0x4 - core index']
  #allocation1 [shape = 'u32[72,128]{1,0:T(1,128)}', space=vmem, size = 0x9000, scoped, tag = 'internal scratch']
  %s0 = inlined_call_operand.vmem [shape: f32[32,1024], index: 0, kind: input, shape index: {}]
  %s1 = inlined_call_operand.vmem [shape: f32[32,1024], index: 1, kind: input, shape index: {}]
  %s2 = inlined_call_operand.vmem [shape: f32[1,1024], index: 2, kind: output, shape index: {}]
  %s3 = sld [smem:[#allocation0]]
  $region18: #{sp_graphlog_kernel_layer.1} parent=0
    _
  %s5 = ssub.s32 1, %s3
  %s6 = scalar_select 0, %s5, %s3
  // Predicated region
  $region2: #{sp_graphlog_kernel_layer.1} parent=0 // pred_check
    _
  $region3: #{sp_graphlog_kernel_layer.1} parent=0 // pred_check_branch
    %8 = sbr.rel (0) target = $region5
  $region4: #{sp_graphlog_kernel_layer.1} parent=0 // pred_region
    _
  $region5: #{sp_graphlog_kernel_layer.1} parent=0 // pred_fallthru
    _
  // Predicated region
  $region6: #{sp_graphlog_kernel_layer.1} parent=0 // pred_check
    _
  $region7: #{sp_graphlog_kernel_layer.1} parent=0 // pred_check_branch
    %10 = sbr.rel (0) target = $region9
  $region8: #{sp_graphlog_kernel_layer.1} parent=0 // pred_region
    _
  $region9: #{sp_graphlog_kernel_layer.1} parent=0 // pred_fallthru
    _
  %v11 = vld [vmem:[%s0] sm:$0xff]
  %v12 = vld [vmem:[%s0 + $0x8] sm:$0xff]
  %v13 = vld [vmem:[%s0 + $0x10] sm:$0xff]
  %v14 = vld [vmem:[%s0 + $0x18] sm:$0xff]
  %v15 = vld [vmem:[%s0 + $0x20] sm:$0xff]
  %v16 = vld [vmem:[%s0 + $0x28] sm:$0xff]
  %v17 = vld [vmem:[%s0 + $0x30] sm:$0xff]
  %v18 = vld [vmem:[%s0 + $0x38] sm:$0xff]
  %v19 = vld [vmem:[%s0 + $0x40] sm:$0xff]
  %v20 = vld [vmem:[%s0 + $0x48] sm:$0xff]
  %v21 = vld [vmem:[%s0 + $0x50] sm:$0xff]
  %v22 = vld [vmem:[%s0 + $0x58] sm:$0xff]
  %v23 = vld [vmem:[%s0 + $0x60] sm:$0xff]
  %v24 = vld [vmem:[%s0 + $0x68] sm:$0xff]
  %v25 = vld [vmem:[%s0 + $0x70] sm:$0xff]
  %v26 = vld [vmem:[%s0 + $0x78] sm:$0xff]
  %v27 = vld [vmem:[%s0 + $0x80] sm:$0xff]
  %v28 = vld [vmem:[%s0 + $0x88] sm:$0xff]
  %v29 = vld [vmem:[%s0 + $0x90] sm:$0xff]
  %v30 = vld [vmem:[%s0 + $0x98] sm:$0xff]
  %v31 = vld [vmem:[%s0 + $0xa0] sm:$0xff]
  %v32 = vld [vmem:[%s0 + $0xa8] sm:$0xff]
  %v33 = vld [vmem:[%s0 + $0xb0] sm:$0xff]
  %v34 = vld [vmem:[%s0 + $0xb8] sm:$0xff]
  %v35 = vld [vmem:[%s0 + $0xc0] sm:$0xff]
  %v36 = vld [vmem:[%s0 + $0xc8] sm:$0xff]
  %v37 = vld [vmem:[%s0 + $0xd0] sm:$0xff]
  %v38 = vld [vmem:[%s0 + $0xd8] sm:$0xff]
  %v39 = vld [vmem:[%s0 + $0xe0] sm:$0xff]
  %v40 = vld [vmem:[%s0 + $0xe8] sm:$0xff]
  %v41 = vld [vmem:[%s0 + $0xf0] sm:$0xff]
  %v42 = vld [vmem:[%s0 + $0xf8] sm:$0xff]
  %v43 = vld [vmem:[%s1] sm:$0xff]
  %v44 = vld [vmem:[%s1 + $0x8] sm:$0xff]
  %v45 = vld [vmem:[%s1 + $0x10] sm:$0xff]
  %v46 = vld [vmem:[%s1 + $0x18] sm:$0xff]
  %v47 = vld [vmem:[%s1 + $0x20] sm:$0xff]
  %v48 = vld [vmem:[%s1 + $0x28] sm:$0xff]
  %v49 = vld [vmem:[%s1 + $0x30] sm:$0xff]
  %v50 = vld [vmem:[%s1 + $0x38] sm:$0xff]
  %v51 = vld [vmem:[%s1 + $0x40] sm:$0xff]
  %v52 = vld [vmem:[%s1 + $0x48] sm:$0xff]
  %v53 = vld [vmem:[%s1 + $0x50] sm:$0xff]
  %v54 = vld [vmem:[%s1 + $0x58] sm:$0xff]
  %v55 = vld [vmem:[%s1 + $0x60] sm:$0xff]
  %v56 = vld [vmem:[%s1 + $0x68] sm:$0xff]
  %v57 = vld [vmem:[%s1 + $0x70] sm:$0xff]
  %v58 = vld [vmem:[%s1 + $0x78] sm:$0xff]
  %v59 = vld [vmem:[%s1 + $0x80] sm:$0xff]
  %v60 = vld [vmem:[%s1 + $0x88] sm:$0xff]
  %v61 = vld [vmem:[%s1 + $0x90] sm:$0xff]
  %v62 = vld [vmem:[%s1 + $0x98] sm:$0xff]
  %v63 = vld [vmem:[%s1 + $0xa0] sm:$0xff]
  %v64 = vld [vmem:[%s1 + $0xa8] sm:$0xff]
  %v65 = vld [vmem:[%s1 + $0xb0] sm:$0xff]
  %v66 = vld [vmem:[%s1 + $0xb8] sm:$0xff]
  %v67 = vld [vmem:[%s1 + $0xc0] sm:$0xff]
  %v68 = vld [vmem:[%s1 + $0xc8] sm:$0xff]
  %v69 = vld [vmem:[%s1 + $0xd0] sm:$0xff]
  %v70 = vld [vmem:[%s1 + $0xd8] sm:$0xff]
  %v71 = vld [vmem:[%s1 + $0xe0] sm:$0xff]
  %v72 = vld [vmem:[%s1 + $0xe8] sm:$0xff]
  %v73 = vld [vmem:[%s1 + $0xf0] sm:$0xff]
  %v74 = vld [vmem:[%s1 + $0xf8] sm:$0xff]
  %v75 = vsub.f32 %v11, %v43
  %v76 = vsub.f32 %v12, %v44
  %v77 = vsub.f32 %v13, %v45
  %v78 = vsub.f32 %v14, %v46
  %v79 = vsub.f32 %v15, %v47
  %v80 = vsub.f32 %v16, %v48
  %v81 = vsub.f32 %v17, %v49
  %v82 = vsub.f32 %v18, %v50
  %v83 = vsub.f32 %v19, %v51
  %v84 = vsub.f32 %v20, %v52
  %v85 = vsub.f32 %v21, %v53
  %v86 = vsub.f32 %v22, %v54
  %v87 = vsub.f32 %v23, %v55
  %v88 = vsub.f32 %v24, %v56
  %v89 = vsub.f32 %v25, %v57
  %v90 = vsub.f32 %v26, %v58
  %v91 = vsub.f32 %v27, %v59
  %v92 = vsub.f32 %v28, %v60
  %v93 = vsub.f32 %v29, %v61
  %v94 = vsub.f32 %v30, %v62
  %v95 = vsub.f32 %v31, %v63
  %v96 = vsub.f32 %v32, %v64
  %v97 = vsub.f32 %v33, %v65
  %v98 = vsub.f32 %v34, %v66
  %v99 = vsub.f32 %v35, %v67
  %v100 = vsub.f32 %v36, %v68
  %v101 = vsub.f32 %v37, %v69
  %v102 = vsub.f32 %v38, %v70
  %v103 = vsub.f32 %v39, %v71
  %v104 = vsub.f32 %v40, %v72
  %v105 = vsub.f32 %v41, %v73
  %v106 = vsub.f32 %v42, %v74
  %v107 = vmul.f32 %v75, %v75
  %v108 = vmul.f32 %v76, %v76
  %v109 = vmul.f32 %v77, %v77
  %v110 = vmul.f32 %v78, %v78
  %v111 = vmul.f32 %v79, %v79
  %v112 = vmul.f32 %v80, %v80
  %v113 = vmul.f32 %v81, %v81
  %v114 = vmul.f32 %v82, %v82
  %v115 = vmul.f32 %v83, %v83
  %v116 = vmul.f32 %v84, %v84
  %v117 = vmul.f32 %v85, %v85
  %v118 = vmul.f32 %v86, %v86
  %v119 = vmul.f32 %v87, %v87
  %v120 = vmul.f32 %v88, %v88
  %v121 = vmul.f32 %v89, %v89
  %v122 = vmul.f32 %v90, %v90
  %v123 = vmul.f32 %v91, %v91
  %v124 = vmul.f32 %v92, %v92
  %v125 = vmul.f32 %v93, %v93
  %v126 = vmul.f32 %v94, %v94
  %v127 = vmul.f32 %v95, %v95
  %v128 = vmul.f32 %v96, %v96
  %v129 = vmul.f32 %v97, %v97
  %v130 = vmul.f32 %v98, %v98
  %v131 = vmul.f32 %v99, %v99
  %v132 = vmul.f32 %v100, %v100
  %v133 = vmul.f32 %v101, %v101
  %v134 = vmul.f32 %v102, %v102
  %v135 = vmul.f32 %v103, %v103
  %v136 = vmul.f32 %v104, %v104
  %v137 = vmul.f32 %v105, %v105
  %v138 = vmul.f32 %v106, %v106
  %v139 = vadd.f32 %v107, %v115
  %v140 = vadd.f32 %v139, %v123
  %v141 = vadd.f32 %v140, %v131
  %v142 = vrot.slane %v141, 4
  %v143 = vadd.f32 %v141, %v142
  %v144 = vrot.slane %v143, 2
  %v145 = vadd.f32 %v143, %v144
  %v146 = vrot.slane %v145, 1
  %v147 = vadd.f32 %v145, %v146
  %v148 = vadd.f32 %v108, %v116
  %v149 = vadd.f32 %v148, %v124
  %v150 = vadd.f32 %v149, %v132
  %v151 = vrot.slane %v150, 4
  %v152 = vadd.f32 %v150, %v151
  %v153 = vrot.slane %v152, 2
  %v154 = vadd.f32 %v152, %v153
  %v155 = vrot.slane %v154, 1
  %v156 = vadd.f32 %v154, %v155
  %v157 = vadd.f32 %v109, %v117
  %v158 = vadd.f32 %v157, %v125
  %v159 = vadd.f32 %v158, %v133
  %v160 = vrot.slane %v159, 4
  %v161 = vadd.f32 %v159, %v160
  %v162 = vrot.slane %v161, 2
  %v163 = vadd.f32 %v161, %v162
  %v164 = vrot.slane %v163, 1
  %v165 = vadd.f32 %v163, %v164
  %v166 = vadd.f32 %v110, %v118
  %v167 = vadd.f32 %v166, %v126
  %v168 = vadd.f32 %v167, %v134
  %v169 = vrot.slane %v168, 4
  %v170 = vadd.f32 %v168, %v169
  %v171 = vrot.slane %v170, 2
  %v172 = vadd.f32 %v170, %v171
  %v173 = vrot.slane %v172, 1
  %v174 = vadd.f32 %v172, %v173
  %v175 = vadd.f32 %v111, %v119
  %v176 = vadd.f32 %v175, %v127
  %v177 = vadd.f32 %v176, %v135
  %v178 = vrot.slane %v177, 4
  %v179 = vadd.f32 %v177, %v178
  %v180 = vrot.slane %v179, 2
  %v181 = vadd.f32 %v179, %v180
  %v182 = vrot.slane %v181, 1
  %v183 = vadd.f32 %v181, %v182
  %v184 = vadd.f32 %v112, %v120
  %v185 = vadd.f32 %v184, %v128
  %v186 = vadd.f32 %v185, %v136
  %v187 = vrot.slane %v186, 4
  %v188 = vadd.f32 %v186, %v187
  %v189 = vrot.slane %v188, 2
  %v190 = vadd.f32 %v188, %v189
  %v191 = vrot.slane %v190, 1
  %v192 = vadd.f32 %v190, %v191
  %v193 = vadd.f32 %v113, %v121
  %v194 = vadd.f32 %v193, %v129
  %v195 = vadd.f32 %v194, %v137
  %v196 = vrot.slane %v195, 4
  %v197 = vadd.f32 %v195, %v196
  %v198 = vrot.slane %v197, 2
  %v199 = vadd.f32 %v197, %v198
  %v200 = vrot.slane %v199, 1
  %v201 = vadd.f32 %v199, %v200
  %v202 = vadd.f32 %v114, %v122
  %v203 = vadd.f32 %v202, %v130
  %v204 = vadd.f32 %v203, %v138
  %v205 = vrot.slane %v204, 4
  %v206 = vadd.f32 %v204, %v205
  %v207 = vrot.slane %v206, 2
  %v208 = vadd.f32 %v206, %v207
  %v209 = vrot.slane %v208, 1
  %v210 = vadd.f32 %v208, %v209
  %v211 = vrsqrt.pop %v147
  %v212 = vmul.f32 %v211, %v147
  %v213 = vmul.f32 %v212, %v211
  %v214 = vmul.f32 0.5, %v213
  %v215 = vsub.f32 1.5, %v214
  %v216 = vmul.f32 %v211, %v215
  %v217 = vmul.f32 %v147, %v216
  %vm218 = vcmp.eq.f32.partialorder %v147, inf
  %v219 = vsel %vm218, %v147, %v217
  %vm220 = vcmp.eq.f32.partialorder %v147, 0.0
  %v221 = vand.u32 %v147, 2147483648
  %v222 = vsel %vm220, %v221, %v219
  %v223 = vrsqrt.pop %v156
  %v224 = vmul.f32 %v223, %v156
  %v225 = vmul.f32 %v224, %v223
  %v226 = vmul.f32 0.5, %v225
  %v227 = vsub.f32 1.5, %v226
  %v228 = vmul.f32 %v223, %v227
  %v229 = vmul.f32 %v156, %v228
  %vm230 = vcmp.eq.f32.partialorder %v156, inf
  %v231 = vsel %vm230, %v156, %v229
  %vm232 = vcmp.eq.f32.partialorder %v156, 0.0
  %v233 = vand.u32 %v156, 2147483648
  %v234 = vsel %vm232, %v233, %v231
  %v235 = vrsqrt.pop %v165
  %v236 = vmul.f32 %v235, %v165
  %v237 = vmul.f32 %v236, %v235
  %v238 = vmul.f32 0.5, %v237
  %v239 = vsub.f32 1.5, %v238
  %v240 = vmul.f32 %v235, %v239
  %v241 = vmul.f32 %v165, %v240
  %vm242 = vcmp.eq.f32.partialorder %v165, inf
  %v243 = vsel %vm242, %v165, %v241
  %vm244 = vcmp.eq.f32.partialorder %v165, 0.0
  %v245 = vand.u32 %v165, 2147483648
  %v246 = vsel %vm244, %v245, %v243
  %v247 = vrsqrt.pop %v174
  %v248 = vmul.f32 %v247, %v174
  %v249 = vmul.f32 %v248, %v247
  %v250 = vmul.f32 0.5, %v249
  %v251 = vsub.f32 1.5, %v250
  %v252 = vmul.f32 %v247, %v251
  %v253 = vmul.f32 %v174, %v252
  %vm254 = vcmp.eq.f32.partialorder %v174, inf
  %v255 = vsel %vm254, %v174, %v253
  %vm256 = vcmp.eq.f32.partialorder %v174, 0.0
  %v257 = vand.u32 %v174, 2147483648
  %v258 = vsel %vm256, %v257, %v255
  %v259 = vrsqrt.pop %v183
  %v260 = vmul.f32 %v259, %v183
  %v261 = vmul.f32 %v260, %v259
  %v262 = vmul.f32 0.5, %v261
  %v263 = vsub.f32 1.5, %v262
  %v264 = vmul.f32 %v259, %v263
  %v265 = vmul.f32 %v183, %v264
  %vm266 = vcmp.eq.f32.partialorder %v183, inf
  %v267 = vsel %vm266, %v183, %v265
  %vm268 = vcmp.eq.f32.partialorder %v183, 0.0
  %v269 = vand.u32 %v183, 2147483648
  %v270 = vsel %vm268, %v269, %v267
  %v271 = vrsqrt.pop %v192
  %v272 = vmul.f32 %v271, %v192
  %v273 = vmul.f32 %v272, %v271
  %v274 = vmul.f32 0.5, %v273
  %v275 = vsub.f32 1.5, %v274
  %v276 = vmul.f32 %v271, %v275
  %v277 = vmul.f32 %v192, %v276
  %vm278 = vcmp.eq.f32.partialorder %v192, inf
  %v279 = vsel %vm278, %v192, %v277
  %vm280 = vcmp.eq.f32.partialorder %v192, 0.0
  %v281 = vand.u32 %v192, 2147483648
  %v282 = vsel %vm280, %v281, %v279
  %v283 = vrsqrt.pop %v201
  %v284 = vmul.f32 %v283, %v201
  %v285 = vmul.f32 %v284, %v283
  %v286 = vmul.f32 0.5, %v285
  %v287 = vsub.f32 1.5, %v286
  %v288 = vmul.f32 %v283, %v287
  %v289 = vmul.f32 %v201, %v288
  %vm290 = vcmp.eq.f32.partialorder %v201, inf
  %v291 = vsel %vm290, %v201, %v289
  %vm292 = vcmp.eq.f32.partialorder %v201, 0.0
  %v293 = vand.u32 %v201, 2147483648
  %v294 = vsel %vm292, %v293, %v291
  %v295 = vrsqrt.pop %v210
  %v296 = vmul.f32 %v295, %v210
  %v297 = vmul.f32 %v296, %v295
  %v298 = vmul.f32 0.5, %v297
  %v299 = vsub.f32 1.5, %v298
  %v300 = vmul.f32 %v295, %v299
  %v301 = vmul.f32 %v210, %v300
  %vm302 = vcmp.eq.f32.partialorder %v210, inf
  %v303 = vsel %vm302, %v210, %v301
  %vm304 = vcmp.eq.f32.partialorder %v210, 0.0
  %v305 = vand.u32 %v210, 2147483648
  %v306 = vsel %vm304, %v305, %v303
  %v307 = vadd.f32 %v222, 0.001
  %v308 = vadd.f32 %v234, 0.001
  %v309 = vadd.f32 %v246, 0.001
  %v310 = vadd.f32 %v258, 0.001
  %v311 = vadd.f32 %v270, 0.001
  %v312 = vadd.f32 %v282, 0.001
  %v313 = vadd.f32 %v294, 0.001
  %v314 = vadd.f32 %v306, 0.001
  %v315 = vlog2.pop %v307
  %v316 = vmul.f32 %v315, 0.6931472
  %v317 = vlog2.pop %v308
  %v318 = vmul.f32 %v317, 0.6931472
  %v319 = vlog2.pop %v309
  %v320 = vmul.f32 %v319, 0.6931472
  %v321 = vlog2.pop %v310
  %v322 = vmul.f32 %v321, 0.6931472
  %v323 = vlog2.pop %v311
  %v324 = vmul.f32 %v323, 0.6931472
  %v325 = vlog2.pop %v312
  %v326 = vmul.f32 %v325, 0.6931472
  %v327 = vlog2.pop %v313
  %v328 = vmul.f32 %v327, 0.6931472
  %v329 = vlog2.pop %v314
  %v330 = vmul.f32 %v329, 0.6931472
  %v339 = vrot.slane %v318, 7
  %v340 = vrot.slane %v320, 6
  %v341 = vrot.slane %v322, 5
  %v342 = vrot.slane %v324, 4
  %v343 = vrot.slane %v326, 3
  %v344 = vrot.slane %v328, 2
  %v345 = vrot.slane %v330, 1
  %vm346 = vcmask 1040384
  %v347 = vsel %vm346, %v316, %v339
  %vm348 = vcmask 1042434
  %v349 = vsel %vm348, %v340, %v341
  %vm350 = vcmask 1041408
  %v351 = vsel %vm350, %v347, %v349
  %vm352 = vcmask 1044484
  %v353 = vsel %vm352, %v342, %v343
  %vm354 = vcmask 1046534
  %v355 = vsel %vm354, %v344, %v345
  %vm356 = vcmask 1045508
  %v357 = vsel %vm356, %v353, %v355
  %vm358 = vcmask 1043456
  %v359 = vsel %vm358, %v351, %v357
  %361 = vst [vmem:[%s2] sm:$0xff] %v359
  // Predicated region
  $region10: #{sp_graphlog_kernel_layer.1} parent=0 // pred_check
    _
  $region11: #{sp_graphlog_kernel_layer.1} parent=0 // pred_check_branch
    %363 = sbr.rel (0) target = $region13
  $region12: #{sp_graphlog_kernel_layer.1} parent=0 // pred_region
    _
  $region13: #{sp_graphlog_kernel_layer.1} parent=0 // pred_fallthru
    _
  // Predicated region
  $region14: #{sp_graphlog_kernel_layer.1} parent=0 // pred_check
    _
  $region15: #{sp_graphlog_kernel_layer.1} parent=0 // pred_check_branch
    %365 = sbr.rel (0) target = $region17
  $region16: #{sp_graphlog_kernel_layer.1} parent=0 // pred_region
    _
  $region17: #{sp_graphlog_kernel_layer.1} parent=0 // pred_fallthru
    _

</llo_original>
